<compile_context>
chip_gen: v7x
topology: tpu7x:2x2x1
jax: 0.10.0
libtpu: 0.0.40
codegen_flags: <defaults>
</compile_context>

<pallas_src>
import functools

import jax
import jax.numpy as jnp
from jax import lax
from jax.experimental import pallas as pl
from jax.experimental.pallas import tpu as pltpu


_SMALL_BYTES = 256 * 1024   # below this, XLA's fused reduce beats kernel launch overhead


def _round_up(x, m):
    return (x + m - 1) // m * m


def _identity_for_max(dtype):
    dtype = jnp.dtype(dtype)
    if jnp.issubdtype(dtype, jnp.floating):
        return float("-inf")
    return int(jnp.iinfo(dtype).min)


def _hw_config():
    """(vmem_limit_bytes, target_block_bytes) per TPU generation."""
    try:
        cap = pltpu.get_tpu_info().vmem_capacity_bytes
    except Exception:
        cap = 64 * 1024 * 1024
    if cap >= 96 * 1024 * 1024:
        # v5e / v6e: 128 MiB VMEM -> big blocks amortize the ~0.35 us/step overhead.
        return 64 * 1024 * 1024, 16 * 1024 * 1024
    # v7x: 64 MiB VMEM, 3.2 TB/s HBM -> 8 MiB blocks, keep headroom under 48 MiB.
    return 48 * 1024 * 1024, 8 * 1024 * 1024


def _choose_tiles(B, S, D, itemsize, target_bytes):
    """Pick (TB, TS, TD) so one *padded* input block is ~target_bytes while
    meeting Mosaic block rules: last two dims multiples of (8, 128) or full
    extent; the output block (TB, TD) additionally wants TB % 8 == 0 or TB == B."""
    if D % 128 == 0:
        TD = min(D, 4096)                     # lane-dense; grid over D uses cdiv
    else:
        TD = D                                # full minor extent required otherwise
    pack = 8 * max(1, 4 // itemsize)          # sublane packing: 8 f32, 16 bf16, 32 i8
    td_pad = _round_up(TD, 128)               # Mosaic pads the lane dim to 128
    row_bytes = _round_up(S, pack) * td_pad * itemsize        # padded (S, TD) slab
    total_pad = B * _round_up(S, pack) * _round_up(D, 128) * itemsize

    if B * row_bytes <= target_bytes:
        TB, TS = B, S                          # whole (per D tile) problem in one block
    elif 8 * row_bytes <= target_bytes:
        TB, TS = (target_bytes // row_bytes) // 8 * 8, S       # full S, many B rows
    else:
        # S is large: tile the reduction axis; the output block doubles as the
        # running-max accumulator across S steps.
        TB = B if B < 8 else 8
        TS = (target_bytes // (TB * td_pad * itemsize)) // pack * pack
        TS = min(max(pack, TS), S)

    # v7x has 2 TensorCores per chip: a large problem whose only >1 grid axis is
    # the "arbitrary" reduction axis would serialize on one core.  Split a
    # parallel axis when we can do so without breaking the block-shape rules.
    large = total_pad >= 2 * target_bytes
    if large and pl.cdiv(B, TB) * pl.cdiv(D, TD) < 2:
        half_tb = (TB // 2) // 8 * 8
        if half_tb >= 8:
            TB = half_tb
        elif TD % 256 == 0:
            TD = TD // 2                       # still a multiple of 128
            if TS < S:                         # refill the freed VMEM budget along S
                TS = min(max(pack, 2 * TS), S)
    return TB, TS, TD


def _max_kernel(x_ref, o_ref, *, init_val, s_valid, ts, accumulate, mask_s):
    # x_ref: (TB, TS, TD) VMEM tile.  o_ref: (TB, TD), same block for every step
    # of the last ("arbitrary") S grid axis -> used directly as the accumulator.
    if not accumulate:
        # Single S block: TS == S exactly (no ragged tail possible).
        o_ref[...] = jnp.max(x_ref[...], axis=1)
        return

    s = pl.program_id(2)
    n_last = pl.num_programs(2) - 1

    @pl.when(s == 0)
    def _first():                              # first S block: plain store, no init fill
        o_ref[...] = jnp.max(x_ref[...], axis=1)

    if mask_s:
        # Only the LAST S block is ragged: keep interior blocks at 1 vmax/element.
        @pl.when((s > 0) & (s < n_last))
        def _interior():
            o_ref[...] = jnp.maximum(o_ref[...], jnp.max(x_ref[...], axis=1))

        @pl.when(s == n_last)
        def _tail():
            s_idx = s * ts + lax.broadcasted_iota(jnp.int32, (ts, 1), 0)
            x = jnp.where(s_idx < s_valid, x_ref[...], init_val)
            o_ref[...] = jnp.maximum(o_ref[...], jnp.max(x, axis=1))
    else:
        @pl.when(s > 0)
        def _rest():
            o_ref[...] = jnp.maximum(o_ref[...], jnp.max(x_ref[...], axis=1))


def max_over_axis_minus2(x, *, force_pallas=False, block_bytes=None):
    """Equivalent of torch.Tensor.max(dim=-2).values for x with ndim >= 2."""
    assert x.ndim >= 2, "max over axis -2 requires at least 2 dims"
    if x.dtype == jnp.bool_:
        # TODO(synk): Mosaic bool max-reduce lowering is shaky; defer to XLA.
        return jnp.max(x, axis=-2)

    shape = tuple(int(d) for d in x.shape)
    *lead, S, D = shape
    itemsize = jnp.dtype(x.dtype).itemsize

    if not force_pallas and x.size * itemsize < _SMALL_BYTES:
        # Tiny input: fixed launch + per-grid-step overhead dominates; let XLA fuse it.
        return jnp.max(x, axis=-2)

    B = 1
    for d in lead:
        B *= d
    x3 = x.reshape(B, S, D)

    vmem_limit, target = _hw_config()
    if block_bytes is not None:
        target = int(block_bytes)

    # Lane-dense fast path for small D: free (metadata-only, row-major) reshape
    # packs G consecutive S rows into one 128-lane row; a tiny G-way max outside
    # the kernel finishes the reduction.
    group = 1
    if D < 128 and 128 % D == 0:
        g = 128 // D
        if S % g == 0:
            group = g
            x3 = x3.reshape(B, S // g, g * D)
            S, D = S // g, g * D
    # TODO(synk): when S % (128 // D) != 0 the small-D path still runs lane-sparse.

    init_val = _identity_for_max(x.dtype)
    TB, TS, TD = _choose_tiles(B, S, D, itemsize, target)
    grid = (pl.cdiv(B, TB), pl.cdiv(D, TD), pl.cdiv(S, TS))
    accumulate = grid[2] > 1
    mask_s = (S % TS) != 0
    assert not (mask_s and not accumulate), "ragged S implies >= 2 reduction blocks"

    kernel = functools.partial(
        _max_kernel,
        init_val=init_val,
        s_valid=S,
        ts=TS,
        accumulate=accumulate,
        mask_s=mask_s,
    )

    out = pl.pallas_call(
        kernel,
        out_shape=jax.ShapeDtypeStruct((B, D), x.dtype),
        grid_spec=pltpu.PrefetchScalarGridSpec(
            num_scalar_prefetch=0,
            grid=grid,
            in_specs=[
                pl.BlockSpec((TB, TS, TD), lambda b, d, s: (b, s, d)),
            ],
            out_specs=pl.BlockSpec((TB, TD), lambda b, d, s: (b, d)),
        ),
        compiler_params=pltpu.CompilerParams(
            dimension_semantics=("parallel", "parallel", "arbitrary"),
            vmem_limit_bytes=vmem_limit,
        ),
        cost_estimate=pl.CostEstimate(
            flops=B * S * D,
            transcendentals=0,
            bytes_accessed=(B * S * D + B * D) * itemsize,
        ),
    )(x3)

    if group > 1:
        out = jnp.max(out.reshape(B, group, D // group), axis=1)
    return out.reshape(*lead, out.shape[-1])


if __name__ == "__main__":
    key = jax.random.PRNGKey(0)
    ks = jax.random.split(key, 6)

    tests = [
        # Spec demo shape: small-D lane-dense reshape path, single block.
        (jax.random.normal(ks[0], (2, 4, 16, 16), dtype=jnp.float32), None),
        # Forced S tiling (small block override): accumulate + ragged-S tail + D split.
        (jax.random.normal(ks[1], (8, 520, 256), dtype=jnp.float32), 256 * 1024),
        # bf16 (sublane packing 16).
        (jax.random.normal(ks[2], (2, 3, 24, 128), dtype=jnp.bfloat16), None),
        # Batch tiling with a ragged last B block (dropped OOB writes).
        (jax.random.normal(ks[3], (4, 25, 16, 512), dtype=jnp.float32), 256 * 1024),
        # D not a multiple of 128 (full-extent lane block, masked output stores).
        (jax.random.normal(ks[4], (3, 40, 200), dtype=jnp.float32), None),
        # Small-D reshape path combined with masked S accumulation.
        (jax.random.normal(ks[5], (3, 1032, 32), dtype=jnp.float32), 256 * 1024),
    ]

    for x, bb in tests:
        y = jax.block_until_ready(
            max_over_axis_minus2(x, force_pallas=True, block_bytes=bb))
        y_ref = jnp.max(x, axis=-2)
        assert y.shape == y_ref.shape, (x.shape, y.shape, y_ref.shape)
        assert jnp.array_equal(y, y_ref), f"mismatch vs reference for input shape {x.shape}"

    print("KERNEL_OK")
</pallas_src>

<mosaic_0001>
module attributes {stable_mosaic.version = 11 : i64} {
  func.func @_max_kernel(%arg0: i32, %arg1: i32, %arg2: i32, %arg3: memref<8x2x128xf32, #tpu.memory_space<vmem>>, %arg4: memref<8x128xf32, #tpu.memory_space<vmem>>) attributes {dimension_semantics = [#tpu.dimension_semantics<parallel>, #tpu.dimension_semantics<parallel>, #tpu.dimension_semantics<arbitrary>], iteration_bounds = array<i64: 1, 1, 1>, scalar_prefetch = 0 : i64, scratch_operands = 0 : i64, tpu.core_type = #tpu.core_type<tc>, window_params = [{transform_indices = @transform_0, window_bounds = array<i64: 8, 2, 128>}, {transform_indices = @transform_1, window_bounds = array<i64: 8, 128>}]} {
    %c0 = arith.constant 0 : index
    %c0_0 = arith.constant 0 : index
    %c0_1 = arith.constant 0 : index
    %0 = vector.load %arg3[%c0, %c0_0, %c0_1] : memref<8x2x128xf32, #tpu.memory_space<vmem>>, vector<8x2x128xf32>
    %cst = arith.constant dense<0xFF800000> : vector<8x128xf32>
    %1 = vector.multi_reduction <maximumf>, %0, %cst [1] : vector<8x2x128xf32> to vector<8x128xf32>
    %c0_2 = arith.constant 0 : index
    %c0_3 = arith.constant 0 : index
    %2 = vector.load %arg4[%c0_2, %c0_3] : memref<8x128xf32, #tpu.memory_space<vmem>>, vector<8x128xf32>
    tpu.vector_store %arg4[%c0_2, %c0_3], %1 {strides = array<i32>} : memref<8x128xf32, #tpu.memory_space<vmem>>, vector<8x128xf32>,
    return
  }
  func.func @transform_0(%arg0: i32, %arg1: i32, %arg2: i32) -> (i32, i32, i32) {
    %c0_i32 = arith.constant 0 : i32
    return %arg0, %arg2, %arg1 : i32, i32, i32
  }
  func.func @transform_1(%arg0: i32, %arg1: i32, %arg2: i32) -> (i32, i32) {
    %c0_i32 = arith.constant 0 : i32
    return %arg0, %arg1 : i32, i32
  }
}

</mosaic_0001>

<llo_original>
// kernel: tpu_custom_call.1
$region0: #{tpu_custom_call.1}
  #allocation0 [shape = 'u32[]', space=smem, size = 0x4, offset = 0x4, fixed_abs, tag = 'smem constant byte address 0x4 - core index']
  #allocation1 [shape = 'u32[144,128]{1,0:T(1,128)}', space=vmem, size = 0x12000, scoped, tag = 'internal scratch']
  %s0 = inlined_call_operand.hbm [shape: f32[8,2,128], index: 0, kind: input, shape index: {}]
  %s1 = inlined_call_operand.hbm [shape: f32[8,128], index: 1, kind: output, shape index: {}]
  %s2 = sld [smem:[#allocation0]]
  $region18: #{tpu_custom_call.1} parent=0
    _
  %s4 = ssub.s32 1, %s2
  %s5 = scalar_select 0, %s4, %s2
  $region1: #{tpu_custom_call.1} parent=0
    #allocation2 [shape = 'u8[8192]{0}', space=vmem, size = 0x2000, scoped, tag = 'input window, operand 0, single buffered']
    #allocation3 [shape = 's32[1]{0}', space=sflag, size = 0x4, scoped, tag = 'scoped memory for tpu_custom_call.1']
    #allocation4 [shape = 's32[1]{0}', space=sflag, size = 0x4, scoped, tag = 'scoped memory for tpu_custom_call.1']
    #allocation5 [shape = 'u8[4096]{0}', space=vmem, size = 0x1000, scoped, tag = 'output window, operand 0, single buffered']
    %6 = vsyncpa [#allocation3], 0
    %7 = vsyncpa [#allocation4], 0
    // Predicated region
    $region2: #{tpu_custom_call.1} parent=1 // pred_check
      _
    $region3: #{tpu_custom_call.1} parent=1 // pred_check_branch
      %9 = sbr.rel (0) target = $region5
    $region4: #{tpu_custom_call.1} parent=1 // pred_region
      %s11 = ssub.s32 256, 256
      %12 = vsyncadd [#allocation3], %s11
      %s13 = sshll.u32 [#allocation2], 4
      %s14 = int_to_ptr.vmem [resolvable:$true] %s13
      %19 = dma.hbm_to_vmem [thread:$0]  %s0, 256, %s14, [#allocation3], 32, 32, 2
    $region5: #{tpu_custom_call.1} parent=1 // pred_fallthru
      _
    // Predicated region
    $region6: #{tpu_custom_call.1} parent=1 // pred_check
      _
    $region7: #{tpu_custom_call.1} parent=1 // pred_check_branch
      %21 = sbr.rel (0) target = $region9
    $region8: #{tpu_custom_call.1} parent=1 // pred_region
      %22 = dma.done [#allocation3], 256
    $region9: #{tpu_custom_call.1} parent=1 // pred_fallthru
      _
    %v23 = vld [vmem:[#allocation2] sm:$0x3]
    %v24 = vld [vmem:[#allocation2 + $0x2] sm:$0x3]
    %v25 = vld [vmem:[#allocation2 + $0x4] sm:$0x3]
    %v26 = vld [vmem:[#allocation2 + $0x6] sm:$0x3]
    %v27 = vld [vmem:[#allocation2 + $0x8] sm:$0x3]
    %v28 = vld [vmem:[#allocation2 + $0xa] sm:$0x3]
    %v29 = vld [vmem:[#allocation2 + $0xc] sm:$0x3]
    %v30 = vld [vmem:[#allocation2 + $0xe] sm:$0x3]
    %vm31 = vcmask 1041408
    %v32 = vsel %vm31, %v23, -inf
    %v33 = vrot.slane %v32, 4
    %v34 = vmax.f32 %v32, %v33
    %v35 = vrot.slane %v34, 2
    %v36 = vmax.f32 %v34, %v35
    %v37 = vrot.slane %v36, 1
    %v38 = vmax.f32 %v36, %v37
    %v39 = vsel %vm31, %v24, -inf
    %v40 = vrot.slane %v39, 4
    %v41 = vmax.f32 %v39, %v40
    %v42 = vrot.slane %v41, 2
    %v43 = vmax.f32 %v41, %v42
    %v44 = vrot.slane %v43, 1
    %v45 = vmax.f32 %v43, %v44
    %v46 = vsel %vm31, %v25, -inf
    %v47 = vrot.slane %v46, 4
    %v48 = vmax.f32 %v46, %v47
    %v49 = vrot.slane %v48, 2
    %v50 = vmax.f32 %v48, %v49
    %v51 = vrot.slane %v50, 1
    %v52 = vmax.f32 %v50, %v51
    %v53 = vsel %vm31, %v26, -inf
    %v54 = vrot.slane %v53, 4
    %v55 = vmax.f32 %v53, %v54
    %v56 = vrot.slane %v55, 2
    %v57 = vmax.f32 %v55, %v56
    %v58 = vrot.slane %v57, 1
    %v59 = vmax.f32 %v57, %v58
    %v60 = vsel %vm31, %v27, -inf
    %v61 = vrot.slane %v60, 4
    %v62 = vmax.f32 %v60, %v61
    %v63 = vrot.slane %v62, 2
    %v64 = vmax.f32 %v62, %v63
    %v65 = vrot.slane %v64, 1
    %v66 = vmax.f32 %v64, %v65
    %v67 = vsel %vm31, %v28, -inf
    %v68 = vrot.slane %v67, 4
    %v69 = vmax.f32 %v67, %v68
    %v70 = vrot.slane %v69, 2
    %v71 = vmax.f32 %v69, %v70
    %v72 = vrot.slane %v71, 1
    %v73 = vmax.f32 %v71, %v72
    %v74 = vsel %vm31, %v29, -inf
    %v75 = vrot.slane %v74, 4
    %v76 = vmax.f32 %v74, %v75
    %v77 = vrot.slane %v76, 2
    %v78 = vmax.f32 %v76, %v77
    %v79 = vrot.slane %v78, 1
    %v80 = vmax.f32 %v78, %v79
    %v81 = vsel %vm31, %v30, -inf
    %v82 = vrot.slane %v81, 4
    %v83 = vmax.f32 %v81, %v82
    %v84 = vrot.slane %v83, 2
    %v85 = vmax.f32 %v83, %v84
    %v86 = vrot.slane %v85, 1
    %v87 = vmax.f32 %v85, %v86
    %vm96 = vcmask 1041409
    %v97 = vsel %vm96, %v45, %v38
    %vm98 = vcmask 1042434
    %v99 = vsel %vm98, %v52, %v97
    %vm100 = vcmask 1043459
    %v101 = vsel %vm100, %v59, %v99
    %vm102 = vcmask 1044484
    %v103 = vsel %vm102, %v66, %v101
    %vm104 = vcmask 1045509
    %v105 = vsel %vm104, %v73, %v103
    %vm106 = vcmask 1046534
    %v107 = vsel %vm106, %v80, %v105
    %vm108 = vcmask 1047559
    %v109 = vsel %vm108, %v87, %v107
    %111 = vst [vmem:[#allocation5] sm:$0xff] %v109
    // Predicated region
    $region10: #{tpu_custom_call.1} parent=1 // pred_check
      _
    $region11: #{tpu_custom_call.1} parent=1 // pred_check_branch
      %113 = sbr.rel (0) target = $region13
    $region12: #{tpu_custom_call.1} parent=1 // pred_region
      %s115 = ssub.s32 128, 128
      %116 = vsyncadd [#allocation4], %s115
      %s118 = sshll.u32 [#allocation5], 4
      %s119 = int_to_ptr.vmem [resolvable:$true] %s118
      %121 = dma.vmem_to_hbm [thread:$0]  %s119, 128, %s1, [#allocation4]
    $region13: #{tpu_custom_call.1} parent=1 // pred_fallthru
      _
    // Predicated region
    $region14: #{tpu_custom_call.1} parent=1 // pred_check
      _
    $region15: #{tpu_custom_call.1} parent=1 // pred_check_branch
      %123 = sbr.rel (0) target = $region17
    $region16: #{tpu_custom_call.1} parent=1 // pred_region
      %124 = dma.done [#allocation4], 128
    $region17: #{tpu_custom_call.1} parent=1 // pred_fallthru
      _
    %125 = vsyncpa [#allocation3], 1
    %126 = vsyncpa [#allocation4], 1

</llo_original>
